<compile_context>
chip_gen: v7x
topology: tpu7x:2x2x1
jax: 0.10.0
libtpu: 0.0.40
codegen_flags: <defaults>
</compile_context>

<pallas_src>
import functools

import jax
import jax.numpy as jnp
from jax.experimental import pallas as pl
from jax.experimental.pallas import tpu as pltpu


def _round_up(x: int, m: int) -> int:
    return (x + m - 1) // m * m


def _pick_tiling(rows: int, tm_max: int):
    """Pick (tile, padded_rows, n_steps): tiles are 128-multiples, padding waste < 128 rows/step."""
    rows_128 = _round_up(rows, 128)
    n_steps = -(-rows_128 // tm_max)                    # cdiv
    tm_eff = _round_up(-(-rows_128 // n_steps), 128)    # smallest 128-multiple tile covering rows
    rows_p = n_steps * tm_eff
    return tm_eff, rows_p, n_steps


def _combined_kernel(xt_ref, wenc_ref, benc_ref, wcls_ref, bcls_ref, out_ref, *, one_hot: bool):
    # Transposed layout: the row (time) axis is the lane axis.
    #   xt_ref   : (K, tm)  bf16   audio patches (transposed)
    #   wenc_ref : (H, K)   bf16   encoder conv weight (transposed)
    #   benc_ref : (H, 1)   f32
    #   wcls_ref : (P, H)   bf16   classifier weight (transposed)
    #   bcls_ref : (P, 1)   f32
    #   out_ref  : (P, tm) f32 softmax  |  (1, tm) i32 argmax index
    feat = jnp.dot(wenc_ref[...], xt_ref[...], preferred_element_type=jnp.float32)      # (H, tm)
    feat = jnp.maximum(feat + benc_ref[...], 0.0)

    logits = jnp.dot(wcls_ref[...], feat.astype(jnp.bfloat16),
                     preferred_element_type=jnp.float32) + bcls_ref[...]                # (P, tm)

    mx = jnp.max(logits, axis=0, keepdims=True)                                         # (1, tm)
    if one_hot:
        # First-max argmax over the phone axis (matches torch.argmax tie-break).
        p = logits.shape[0]
        row = jax.lax.broadcasted_iota(jnp.int32, logits.shape, 0).astype(jnp.float32)
        masked = jnp.where(logits == mx, row, float(p))       # sentinel p for non-max entries
        idx = jnp.min(masked, axis=0, keepdims=True)          # (1, tm) first index attaining max
        out_ref[...] = idx.astype(out_ref.dtype)
    else:
        e = jnp.exp(logits - mx)
        denom = jnp.sum(e, axis=0, keepdims=True)                                       # (1, tm)
        out_ref[...] = (e * pl.reciprocal(denom, approx=True)).astype(out_ref.dtype)


def model_phone_combined(data, w_enc, b_enc, w_cls, b_cls, *, one_hot: bool, tm: int = 2048):
    """data: (B, T) raw audio (C=1 implied).  Returns (B, S, P) with S = T // K."""
    B, T = data.shape
    K, H = w_enc.shape
    Hc, P = w_cls.shape
    assert Hc == H and T % K == 0
    assert tm % 128 == 0 and tm >= 128
    S = T // K
    rows = B * S

    # Row tile = lane axis of every block; balanced split keeps tiles big and padding tiny.
    tm_eff, rows_p, n_steps = _pick_tiling(rows, tm)
    grid = (n_steps,)

    # Non-overlapping conv patches, zero-padded, transposed so rows sit on lanes, cast to bf16.
    xp = data.reshape(rows, K)
    if rows_p != rows:
        xp = jnp.pad(xp, ((0, rows_p - rows), (0, 0)))
    x_t = xp.T.astype(jnp.bfloat16)                     # (K, rows_p)

    w_enc_t = w_enc.T.astype(jnp.bfloat16)              # (H, K)
    w_cls_t = w_cls.T.astype(jnp.bfloat16)              # (P, H)
    b_enc_t = b_enc.reshape(H, 1).astype(jnp.float32)   # (H, 1)
    b_cls_t = b_cls.reshape(P, 1).astype(jnp.float32)   # (P, 1)

    if one_hot:
        out_shape = jax.ShapeDtypeStruct((1, rows_p), jnp.int32)
        out_spec = pl.BlockSpec((1, tm_eff), lambda i: (0, i))
        out_bytes = rows_p * 4
        transcendentals = 0
    else:
        out_shape = jax.ShapeDtypeStruct((P, rows_p), jnp.float32)
        out_spec = pl.BlockSpec((P, tm_eff), lambda i: (0, i))
        out_bytes = rows_p * P * 4
        transcendentals = rows_p * P

    cost = pl.CostEstimate(
        flops=2 * rows_p * (K * H + H * P),
        transcendentals=transcendentals,
        bytes_accessed=rows_p * K * 2 + (K * H + H * P) * 2 + (H + P) * 4 + out_bytes,
    )

    kernel = functools.partial(_combined_kernel, one_hot=one_hot)

    out = pl.pallas_call(
        kernel,
        out_shape=out_shape,
        grid_spec=pl.GridSpec(
            grid=grid,
            in_specs=[
                pl.BlockSpec((K, tm_eff), lambda i: (0, i)),   # audio patches (transposed)
                pl.BlockSpec((H, K), lambda i: (0, 0)),        # encoder weight (resident)
                pl.BlockSpec((H, 1), lambda i: (0, 0)),        # encoder bias   (resident)
                pl.BlockSpec((P, H), lambda i: (0, 0)),        # classifier weight (resident)
                pl.BlockSpec((P, 1), lambda i: (0, 0)),        # classifier bias   (resident)
            ],
            out_specs=out_spec,
        ),
        compiler_params=pltpu.CompilerParams(dimension_semantics=("parallel",)),
        cost_estimate=cost,
    )(x_t, w_enc_t, b_enc_t, w_cls_t, b_cls_t)

    if one_hot:
        idx = out[0, :rows]                                   # (rows,) int32 argmax indices
        pred = jax.nn.one_hot(idx, P, dtype=jnp.int32)        # toOneHot scatter (int32 vs torch long)
    else:
        pred = out[:, :rows].T                                # (rows, P)
    return pred.reshape(B, S, P)


def _reference(data, w_enc, b_enc, w_cls, b_cls, one_hot):
    # Mirrors the kernel's bf16 input/weight rounding, f32 accumulation.
    B, T = data.shape
    K, H = w_enc.shape
    P = w_cls.shape[1]
    S = T // K
    f32 = jnp.float32
    xb = data.reshape(B * S, K).astype(jnp.bfloat16).astype(f32)
    web = w_enc.astype(jnp.bfloat16).astype(f32)
    wcb = w_cls.astype(jnp.bfloat16).astype(f32)
    feat = jnp.maximum(xb @ web + b_enc, 0.0)
    logits = feat.astype(jnp.bfloat16).astype(f32) @ wcb + b_cls
    if one_hot:
        idx = jnp.argmax(logits, axis=-1)
        out = jax.nn.one_hot(idx, P, dtype=jnp.int32)
    else:
        out = jax.nn.softmax(logits, axis=-1)
    return out.reshape(B, S, P)


if __name__ == "__main__":
    # Small shapes consistent with the module: batch=2, raw audio length=128,
    # conv kernel/stride (downsampling factor) K=16 -> seq=8, hidden=32, phones=16.
    B, T, K, H, P = 2, 128, 16, 32, 16

    key = jax.random.PRNGKey(0)
    k_data, k_we, k_be, k_wc, k_bc, k_data2 = jax.random.split(key, 6)
    data = jax.random.normal(k_data, (B, T), dtype=jnp.float32)
    w_enc = 0.1 * jax.random.normal(k_we, (K, H), dtype=jnp.float32)
    b_enc = 0.1 * jax.random.normal(k_be, (H,), dtype=jnp.float32)
    w_cls = 0.1 * jax.random.normal(k_wc, (H, P), dtype=jnp.float32)
    b_cls = 0.1 * jax.random.normal(k_bc, (P,), dtype=jnp.float32)

    # oneHot = False path (softmax probabilities).
    pred_soft = jax.block_until_ready(
        model_phone_combined(data, w_enc, b_enc, w_cls, b_cls, one_hot=False))
    ref_soft = _reference(data, w_enc, b_enc, w_cls, b_cls, one_hot=False)
    assert pred_soft.shape == (B, T // K, P)
    assert jnp.allclose(pred_soft, ref_soft, atol=1e-2, rtol=1e-2), "softmax path mismatch"

    # oneHot = True path (argmax -> one-hot, int32 instead of torch.long).
    pred_hot = jax.block_until_ready(
        model_phone_combined(data, w_enc, b_enc, w_cls, b_cls, one_hot=True))
    ref_hot = _reference(data, w_enc, b_enc, w_cls, b_cls, one_hot=True)
    assert pred_hot.shape == (B, T // K, P)
    assert jnp.array_equal(pred_hot, ref_hot), "one-hot path mismatch"

    # Larger run: rows = 3*512 = 1536 -> balanced tiling picks 2 steps of 768 rows (zero padding waste).
    B2, T2 = 3, 16 * 512
    data2 = jax.random.normal(k_data2, (B2, T2), dtype=jnp.float32)
    pred2 = jax.block_until_ready(
        model_phone_combined(data2, w_enc, b_enc, w_cls, b_cls, one_hot=False, tm=1024))
    ref2 = _reference(data2, w_enc, b_enc, w_cls, b_cls, one_hot=False)
    assert jnp.allclose(pred2, ref2, atol=1e-2, rtol=1e-2), "multi-tile softmax mismatch"
    pred2h = jax.block_until_ready(
        model_phone_combined(data2, w_enc, b_enc, w_cls, b_cls, one_hot=True, tm=1024))
    ref2h = _reference(data2, w_enc, b_enc, w_cls, b_cls, one_hot=True)
    assert jnp.array_equal(pred2h, ref2h), "multi-tile one-hot mismatch"

    print("KERNEL_OK")
</pallas_src>

<mosaic_0001>
module attributes {stable_mosaic.version = 11 : i64} {
  func.func @_combined_kernel(%arg0: i32, %arg1: memref<16x128xbf16, #tpu.memory_space<vmem>>, %arg2: memref<32x16xbf16, #tpu.memory_space<vmem>>, %arg3: memref<32x1xf32, #tpu.memory_space<vmem>>, %arg4: memref<16x32xbf16, #tpu.memory_space<vmem>>, %arg5: memref<16x1xf32, #tpu.memory_space<vmem>>, %arg6: memref<16x128xf32, #tpu.memory_space<vmem>>) attributes {dimension_semantics = [#tpu.dimension_semantics<parallel>], iteration_bounds = array<i64: 1>, scalar_prefetch = 0 : i64, scratch_operands = 0 : i64, tpu.core_type = #tpu.core_type<tc>, window_params = [{transform_indices = @transform_0, window_bounds = array<i64: 16, 128>}, {pipeline_mode = #tpu.pipeline_mode<synchronous>, transform_indices = @transform_1, window_bounds = array<i64: 32, 16>}, {pipeline_mode = #tpu.pipeline_mode<synchronous>, transform_indices = @transform_2, window_bounds = array<i64: 32, 1>}, {pipeline_mode = #tpu.pipeline_mode<synchronous>, transform_indices = @transform_3, window_bounds = array<i64: 16, 32>}, {pipeline_mode = #tpu.pipeline_mode<synchronous>, transform_indices = @transform_4, window_bounds = array<i64: 16, 1>}, {transform_indices = @transform_5, window_bounds = array<i64: 16, 128>}]} {
    %c0 = arith.constant 0 : index
    %c0_0 = arith.constant 0 : index
    %0 = vector.load %arg2[%c0, %c0_0] : memref<32x16xbf16, #tpu.memory_space<vmem>>, vector<32x16xbf16>
    %c0_1 = arith.constant 0 : index
    %c0_2 = arith.constant 0 : index
    %1 = vector.load %arg1[%c0_1, %c0_2] : memref<16x128xbf16, #tpu.memory_space<vmem>>, vector<16x128xbf16>
    %cst = arith.constant dense<0.000000e+00> : vector<32x128xf32>
    %2 = tpu.matmul %0, %1, %cst {dimension_numbers = #tpu.dot_dimension_numbers<[1], [0], [0], [1], [0, 0, 1, 1], [], []>} : vector<32x16xbf16>, vector<16x128xbf16>, vector<32x128xf32> -> vector<32x128xf32>
    %c0_3 = arith.constant 0 : index
    %c0_4 = arith.constant 0 : index
    %3 = vector.load %arg3[%c0_3, %c0_4] : memref<32x1xf32, #tpu.memory_space<vmem>>, vector<32x1xf32>
    %4 = vector.broadcast %3 : vector<32x1xf32> to vector<32x128xf32>
    %5 = arith.addf %2, %4 : vector<32x128xf32>
    %cst_5 = arith.constant 0.000000e+00 : f32
    %6 = vector.broadcast %cst_5 : f32 to vector<32x128xf32>
    %7 = arith.maximumf %5, %6 : vector<32x128xf32>
    %c0_6 = arith.constant 0 : index
    %c0_7 = arith.constant 0 : index
    %8 = vector.load %arg4[%c0_6, %c0_7] : memref<16x32xbf16, #tpu.memory_space<vmem>>, vector<16x32xbf16>
    %9 = arith.truncf %7 : vector<32x128xf32> to vector<32x128xbf16>
    %cst_8 = arith.constant dense<0.000000e+00> : vector<16x128xf32>
    %10 = tpu.matmul %8, %9, %cst_8 {dimension_numbers = #tpu.dot_dimension_numbers<[1], [0], [0], [1], [0, 0, 1, 1], [], []>} : vector<16x32xbf16>, vector<32x128xbf16>, vector<16x128xf32> -> vector<16x128xf32>
    %c0_9 = arith.constant 0 : index
    %c0_10 = arith.constant 0 : index
    %11 = vector.load %arg5[%c0_9, %c0_10] : memref<16x1xf32, #tpu.memory_space<vmem>>, vector<16x1xf32>
    %12 = vector.broadcast %11 : vector<16x1xf32> to vector<16x128xf32>
    %13 = arith.addf %10, %12 : vector<16x128xf32>
    %cst_11 = arith.constant dense<0xFF800000> : vector<128xf32>
    %14 = vector.multi_reduction <maximumf>, %13, %cst_11 [0] : vector<16x128xf32> to vector<128xf32>
    %15 = vector.shape_cast %14 : vector<128xf32> to vector<1x128xf32>
    %16 = vector.broadcast %15 : vector<1x128xf32> to vector<16x128xf32>
    %17 = arith.subf %13, %16 : vector<16x128xf32>
    %18 = math.exp %17 : vector<16x128xf32>
    %cst_12 = arith.constant dense<0.000000e+00> : vector<128xf32>
    %19 = vector.multi_reduction <add>, %18, %cst_12 [0] : vector<16x128xf32> to vector<128xf32>
    %20 = vector.shape_cast %19 : vector<128xf32> to vector<1x128xf32>
    %21 = tpu.reciprocal %20 {approx = true} : vector<1x128xf32> -> vector<1x128xf32>
    %22 = vector.broadcast %21 : vector<1x128xf32> to vector<16x128xf32>
    %23 = arith.mulf %18, %22 : vector<16x128xf32>
    %c0_13 = arith.constant 0 : index
    %c0_14 = arith.constant 0 : index
    %24 = vector.load %arg6[%c0_13, %c0_14] : memref<16x128xf32, #tpu.memory_space<vmem>>, vector<16x128xf32>
    tpu.vector_store %arg6[%c0_13, %c0_14], %23 {strides = array<i32>} : memref<16x128xf32, #tpu.memory_space<vmem>>, vector<16x128xf32>,
    return
  }
  func.func @transform_0(%arg0: i32) -> (i32, i32) {
    %c0_i32 = arith.constant 0 : i32
    %c0_i32_0 = arith.constant 0 : i32
    return %c0_i32, %arg0 : i32, i32
  }
  func.func @transform_1(%arg0: i32) -> (i32, i32) {
    %c0_i32 = arith.constant 0 : i32
    %c0_i32_0 = arith.constant 0 : i32
    %c0_i32_1 = arith.constant 0 : i32
    return %c0_i32, %c0_i32_0 : i32, i32
  }
  func.func @transform_2(%arg0: i32) -> (i32, i32) {
    %c0_i32 = arith.constant 0 : i32
    %c0_i32_0 = arith.constant 0 : i32
    %c0_i32_1 = arith.constant 0 : i32
    return %c0_i32, %c0_i32_0 : i32, i32
  }
  func.func @transform_3(%arg0: i32) -> (i32, i32) {
    %c0_i32 = arith.constant 0 : i32
    %c0_i32_0 = arith.constant 0 : i32
    %c0_i32_1 = arith.constant 0 : i32
    return %c0_i32, %c0_i32_0 : i32, i32
  }
  func.func @transform_4(%arg0: i32) -> (i32, i32) {
    %c0_i32 = arith.constant 0 : i32
    %c0_i32_0 = arith.constant 0 : i32
    %c0_i32_1 = arith.constant 0 : i32
    return %c0_i32, %c0_i32_0 : i32, i32
  }
  func.func @transform_5(%arg0: i32) -> (i32, i32) {
    %c0_i32 = arith.constant 0 : i32
    %c0_i32_0 = arith.constant 0 : i32
    return %c0_i32, %arg0 : i32, i32
  }
}

</mosaic_0001>

<llo_original>
// kernel: tpu_custom_call.1
$region0: #{tpu_custom_call.1}
  #allocation0 [shape = 'u32[]', space=smem, size = 0x4, offset = 0x4, fixed_abs, tag = 'smem constant byte address 0x4 - core index']
  #allocation1 [shape = 'u32[144,128]{1,0:T(1,128)}', space=vmem, size = 0x12000, scoped, tag = 'internal scratch']
  %s0 = inlined_call_operand.vmem [shape: bf16[16,128], index: 0, kind: input, shape index: {}]
  %s1 = inlined_call_operand.vmem [shape: bf16[32,16], index: 1, kind: input, shape index: {}]
  %s2 = inlined_call_operand.vmem [shape: f32[32,1], index: 2, kind: input, shape index: {}]
  %s3 = inlined_call_operand.vmem [shape: bf16[16,32], index: 3, kind: input, shape index: {}]
  %s4 = inlined_call_operand.vmem [shape: f32[16,1], index: 4, kind: input, shape index: {}]
  %s5 = inlined_call_operand.hbm [shape: f32[16,128], index: 5, kind: output, shape index: {}]
  %s6 = sld [smem:[#allocation0]]
  $region30: #{tpu_custom_call.1} parent=0
    _
  %s8 = ssub.s32 1, %s6
  %s9 = scalar_select 0, %s8, %s6
  $region1: #{tpu_custom_call.1} parent=0
    #allocation2 [shape = 'u8[8192]{0}', space=vmem, size = 0x2000, scoped, tag = 'output window, operand 0, single buffered']
    #allocation3 [shape = 's32[1]{0}', space=sflag, size = 0x4, scoped, tag = 'scoped memory for tpu_custom_call.1']
    %10 = vsyncpa [#allocation3], 0
    // Predicated region
    $region2: #{tpu_custom_call.1} parent=1 // pred_check
      _
    $region3: #{tpu_custom_call.1} parent=1 // pred_check_branch
      %12 = sbr.rel (0) target = $region5
    $region4: #{tpu_custom_call.1} parent=1 // pred_region
      _
    $region5: #{tpu_custom_call.1} parent=1 // pred_fallthru
      _
    // Predicated region
    $region6: #{tpu_custom_call.1} parent=1 // pred_check
      _
    $region7: #{tpu_custom_call.1} parent=1 // pred_check_branch
      %14 = sbr.rel (0) target = $region9
    $region8: #{tpu_custom_call.1} parent=1 // pred_region
      _
    $region9: #{tpu_custom_call.1} parent=1 // pred_fallthru
      _
    // Predicated region
    $region10: #{tpu_custom_call.1} parent=1 // pred_check
      _
    $region11: #{tpu_custom_call.1} parent=1 // pred_check_branch
      %16 = sbr.rel (0) target = $region13
    $region12: #{tpu_custom_call.1} parent=1 // pred_region
      _
    $region13: #{tpu_custom_call.1} parent=1 // pred_fallthru
      _
    // Predicated region
    $region14: #{tpu_custom_call.1} parent=1 // pred_check
      _
    $region15: #{tpu_custom_call.1} parent=1 // pred_check_branch
      %18 = sbr.rel (0) target = $region17
    $region16: #{tpu_custom_call.1} parent=1 // pred_region
      _
    $region17: #{tpu_custom_call.1} parent=1 // pred_fallthru
      _
    // Predicated region
    $region18: #{tpu_custom_call.1} parent=1 // pred_check
      _
    $region19: #{tpu_custom_call.1} parent=1 // pred_check_branch
      %20 = sbr.rel (0) target = $region21
    $region20: #{tpu_custom_call.1} parent=1 // pred_region
      _
    $region21: #{tpu_custom_call.1} parent=1 // pred_fallthru
      _
    %v22 = vld [vmem:[%s1] sm:$0xf]
    %v23 = vld [vmem:[%s1 + $0x4] sm:$0xf]
    %v24 = vld [vmem:[%s1 + $0x8] sm:$0xf]
    %v25 = vld [vmem:[%s1 + $0xc] sm:$0xf]
    %v26 = vld [vmem:[%s0] sm:$0xf]
    %v27 = vld [vmem:[%s0 + $0x4] sm:$0xf]
    %v28 = vld [vmem:[%s2] sm:$0xff]
    %v29 = vld [vmem:[%s2 + $0x8] sm:$0xff]
    %v30 = vld [vmem:[%s2 + $0x10] sm:$0xff]
    %v31 = vld [vmem:[%s2 + $0x18] sm:$0xff]
    %33 = vset.pattern.permute.xlu0 0
    %34 = vperm.xlu0 %33, %v28
    %v35 = vpop.permute.xlu0 %34
    %38 = vset.pattern.permute.xlu0 0
    %39 = vperm.xlu0 %38, %v29
    %v40 = vpop.permute.xlu0 %39
    %43 = vset.pattern.permute.xlu0 0
    %44 = vperm.xlu0 %43, %v30
    %v45 = vpop.permute.xlu0 %44
    %48 = vset.pattern.permute.xlu0 0
    %49 = vperm.xlu0 %48, %v31
    %v50 = vpop.permute.xlu0 %49
    %v56 = vunpack.c.l.b16 %v22
    %v57 = vunpack.c.l.b16 %v23
    %v58 = vunpack.c.l.b16 %v24
    %v59 = vunpack.c.l.b16 %v25
    %v60 = vpack.c.b16 %v57, %v56
    %v61 = vpack.c.b16 %v59, %v58
    %v64 = vunpack.c.l.b16 %v26
    %v65 = vunpack.c.l.b16 %v27
    %v66 = vpack.c.b16 %v65, %v64
    %vm68 = vcmask 130048
    %v70 = vsel %vm68, %v60, 0
    %v73 = vsel %vm68, %v61, 0
    %75 = vmatprep.subr.bf16.mxu0 0
    %76 = vmatpush1.bf16.msra.mxu0 %v66
    %77 = vmatprep.subr.bf16.mxu0 0
    %78 = vmatpush1.bf16.msra.mxu0 0
    %79 = vmatprep.subr.bf16.mxu0 0
    %80 = vmatpush1.bf16.msra.mxu0 0
    %81 = vmatprep.subr.bf16.mxu0 0
    %82 = vmatpush1.bf16.msra.mxu0 0
    %83 = vmatprep.subr.bf16.mxu0 0
    %84 = vmatpush1.bf16.msra.mxu0 0
    %85 = vmatprep.subr.bf16.mxu0 0
    %86 = vmatpush1.bf16.msra.mxu0 0
    %87 = vmatprep.subr.bf16.mxu0 0
    %88 = vmatpush1.bf16.msra.mxu0 0
    %89 = vmatprep.subr.bf16.mxu0 0
    %90 = vmatpush1.bf16.msra.mxu0 0
    %91 = vmatprep.subr.bf16.mxu0 0
    %92 = vmatpush1.bf16.msra.mxu0 0
    %93 = vmatprep.subr.bf16.mxu0 0
    %94 = vmatpush1.bf16.msra.mxu0 0
    %95 = vmatprep.subr.bf16.mxu0 0
    %96 = vmatpush1.bf16.msra.mxu0 0
    %97 = vmatprep.subr.bf16.mxu0 0
    %98 = vmatpush1.bf16.msra.mxu0 0
    %99 = vmatprep.subr.bf16.mxu0 0
    %100 = vmatpush1.bf16.msra.mxu0 0
    %101 = vmatprep.subr.bf16.mxu0 0
    %102 = vmatpush1.bf16.msra.mxu0 0
    %103 = vmatprep.subr.bf16.mxu0 0
    %104 = vmatpush1.bf16.msra.mxu0 0
    %105 = vmatprep.subr.bf16.mxu0 0
    %106 = vmatpush1.bf16.msra.mxu0 0
    %107 = vmatprep.mubr.bf16.mxu0 0
    %108 = vmatmul.mubr.bf16.gmra.mrb[0].mxu0 %v70
    %v109 = vpop.f32.mrb[0].mxu0
    %v110 = vadd.f32 %v35, %v109
    %v111 = vpop.f32.mrb[0].mxu0
    %v112 = vpop.f32.mrb[0].mxu0
    %v113 = vadd.f32 %v40, %v112
    %v114 = vpop.f32.mrb[0].mxu0
    %115 = vmatprep.mubr.bf16.mxu0 0
    %116 = vmatmul.mubr.bf16.gmra.mrb[0].mxu0 %v73
    %v117 = vpop.f32.mrb[0].mxu0
    %v118 = vadd.f32 %v45, %v117
    %v119 = vpop.f32.mrb[0].mxu0
    %v120 = vpop.f32.mrb[0].mxu0
    %v121 = vadd.f32 %v50, %v120
    %v122 = vpop.f32.mrb[0].mxu0
    %123 = vdwg.mxu0
    %v124 = vmax.f32 %v110, 0.0
    %v125 = vmax.f32 %v113, 0.0
    %v126 = vmax.f32 %v118, 0.0
    %v127 = vmax.f32 %v121, 0.0
    %v128 = vld [vmem:[%s3] sm:$0xf]
    %v129 = vld [vmem:[%s3 + $0x4] sm:$0xf]
    %v130 = vpack.c.bf16 %v125, %v124
    %v131 = vpack.c.bf16 %v127, %v126
    %v132 = vld [vmem:[%s4] sm:$0xff]
    %v133 = vld [vmem:[%s4 + $0x8] sm:$0xff]
    %135 = vset.pattern.permute.xlu0 0
    %136 = vperm.xlu0 %135, %v132
    %v137 = vpop.permute.xlu0 %136
    %140 = vset.pattern.permute.xlu0 0
    %141 = vperm.xlu0 %140, %v133
    %v142 = vpop.permute.xlu0 %141
    %v146 = vunpack.c.l.b16 %v128
    %v147 = vunpack.c.l.b16 %v129
    %v148 = vpack.c.b16 %v147, %v146
    %vm149 = vcmask 261120
    %v151 = vsel %vm149, %v148, 0
    %153 = vmatprep.subr.bf16.mxu0 0
    %154 = vmatpush1.bf16.msra.mxu0 %v130
    %155 = vmatprep.subr.bf16.mxu0 0
    %156 = vmatpush1.bf16.msra.mxu0 %v131
    %157 = vmatprep.subr.bf16.mxu0 0
    %158 = vmatpush1.bf16.msra.mxu0 0
    %159 = vmatprep.subr.bf16.mxu0 0
    %160 = vmatpush1.bf16.msra.mxu0 0
    %161 = vmatprep.subr.bf16.mxu0 0
    %162 = vmatpush1.bf16.msra.mxu0 0
    %163 = vmatprep.subr.bf16.mxu0 0
    %164 = vmatpush1.bf16.msra.mxu0 0
    %165 = vmatprep.subr.bf16.mxu0 0
    %166 = vmatpush1.bf16.msra.mxu0 0
    %167 = vmatprep.subr.bf16.mxu0 0
    %168 = vmatpush1.bf16.msra.mxu0 0
    %169 = vmatprep.subr.bf16.mxu0 0
    %170 = vmatpush1.bf16.msra.mxu0 0
    %171 = vmatprep.subr.bf16.mxu0 0
    %172 = vmatpush1.bf16.msra.mxu0 0
    %173 = vmatprep.subr.bf16.mxu0 0
    %174 = vmatpush1.bf16.msra.mxu0 0
    %175 = vmatprep.subr.bf16.mxu0 0
    %176 = vmatpush1.bf16.msra.mxu0 0
    %177 = vmatprep.subr.bf16.mxu0 0
    %178 = vmatpush1.bf16.msra.mxu0 0
    %179 = vmatprep.subr.bf16.mxu0 0
    %180 = vmatpush1.bf16.msra.mxu0 0
    %181 = vmatprep.subr.bf16.mxu0 0
    %182 = vmatpush1.bf16.msra.mxu0 0
    %183 = vmatprep.subr.bf16.mxu0 0
    %184 = vmatpush1.bf16.msra.mxu0 0
    %185 = vmatprep.mubr.bf16.mxu0 0
    %186 = vmatmul.mubr.bf16.gmra.mrb[0].mxu0 %v151
    %v187 = vpop.f32.mrb[0].mxu0
    %v188 = vadd.f32 %v137, %v187
    %v189 = vpop.f32.mrb[0].mxu0
    %v190 = vpop.f32.mrb[0].mxu0
    %v191 = vadd.f32 %v142, %v190
    %v192 = vpop.f32.mrb[0].mxu0
    %193 = vdwg.mxu0
    %v194 = vmax.f32 %v188, %v191
    %v195 = vrot.slane %v194, 4
    %v196 = vmax.f32 %v194, %v195
    %v197 = vrot.slane %v196, 2
    %v198 = vmax.f32 %v196, %v197
    %v199 = vrot.slane %v198, 1
    %v200 = vmax.f32 %v198, %v199
    %v201 = vsub.f32 %v188, %v200
    %v202 = vsub.f32 %v191, %v200
    %v203 = vmul.f32 %v201, 1.442695
    %v204 = vpow.pop %v203
    %v205 = vmul.f32 %v202, 1.442695
    %v206 = vpow.pop %v205
    %v207 = vadd.f32 %v204, %v206
    %v208 = vrot.slane %v207, 4
    %v209 = vadd.f32 %v207, %v208
    %v210 = vrot.slane %v209, 2
    %v211 = vadd.f32 %v209, %v210
    %v212 = vrot.slane %v211, 1
    %v213 = vadd.f32 %v211, %v212
    %v214 = vrcp.pop %v213
    %v215 = vmul.f32 %v204, %v214
    %v216 = vmul.f32 %v206, %v214
    %217 = vst [vmem:[#allocation2] sm:$0xff] %v215
    %218 = vst [vmem:[#allocation2 + $0x8] sm:$0xff] %v216
    // Predicated region
    $region22: #{tpu_custom_call.1} parent=1 // pred_check
      _
    $region23: #{tpu_custom_call.1} parent=1 // pred_check_branch
      %220 = sbr.rel (0) target = $region25
    $region24: #{tpu_custom_call.1} parent=1 // pred_region
      %s222 = ssub.s32 256, 256
      %223 = vsyncadd [#allocation3], %s222
      %s224 = sshll.u32 [#allocation2], 4
      %s225 = int_to_ptr.vmem [resolvable:$true] %s224
      %230 = dma.vmem_to_hbm [thread:$0]  %s225, 256, %s5, [#allocation3], 128, 128, 8
    $region25: #{tpu_custom_call.1} parent=1 // pred_fallthru
      _
    // Predicated region
    $region26: #{tpu_custom_call.1} parent=1 // pred_check
      _
    $region27: #{tpu_custom_call.1} parent=1 // pred_check_branch
      %232 = sbr.rel (0) target = $region29
    $region28: #{tpu_custom_call.1} parent=1 // pred_region
      %233 = dma.done [#allocation3], 256
    $region29: #{tpu_custom_call.1} parent=1 // pred_fallthru
      _
    %234 = vsyncpa [#allocation3], 1

</llo_original>
